<compile_context>
chip_gen: v5e
topology: v5e:2x2
jax: 0.10.0
libtpu: 0.0.40
codegen_flags: <defaults>
</compile_context>

<pallas_src>
import math

import jax
import jax.numpy as jnp
from jax.experimental import pallas as pl
from jax.experimental.pallas import tpu as pltpu


def _round_up(x: int, m: int) -> int:
    return ((x + m - 1) // m) * m


def _round_down(x: int, m: int) -> int:
    return (x // m) * m


def _physical_vmem_bytes() -> int:
    try:
        return int(pltpu.get_tpu_info().vmem_capacity_bytes)
    except Exception:
        return 128 * 1024 * 1024  # v5e / v6e value; safe fallback


_VMEM_BYTES = _physical_vmem_bytes()
# ~8 MiB tiles on v7x (3.2 TB/s HBM, 64 MiB VMEM), ~4 MiB on v5e/v6e.
_TARGET_TILE_BYTES = (8 if _VMEM_BYTES <= 64 * 1024 * 1024 else 4) * 1024 * 1024


def _vmem_limit(tile_bytes: int) -> int:
    # x + out are double-buffered (~4x tile), plus slack for f32 intermediates,
    # capped 8 MiB below physical VMEM (important on v7x: 64 MiB total).
    want = 6 * tile_bytes + 4 * 1024 * 1024
    return int(min(_VMEM_BYTES - 8 * 1024 * 1024, max(32 * 1024 * 1024, want)))


# ---------------------------------------------------------------------------
# Kernels
# ---------------------------------------------------------------------------

def _dyntanh_kernel(alpha_ref, w_ref, b_ref, x_ref, o_ref):
    # alpha_ref: (1, 1) f32 in SMEM.
    # w_ref, b_ref: (1, W) f32 in VMEM (resident; constant index_map).
    # x_ref, o_ref: (TR, W) tile in VMEM.
    alpha = alpha_ref[0, 0]
    x = x_ref[...].astype(jnp.float32)
    y = jnp.tanh(alpha * x)                                   # EUP slot
    o_ref[...] = (y * w_ref[...] + b_ref[...]).astype(o_ref.dtype)


def _dyntanh_nchw_kernel(alpha_ref, w_ref, b_ref, x_ref, o_ref):
    # Fused NHWC -> NCHW path.
    # x_ref: (T_HW, C) NHWC tile; o_ref: (C, T_HW) NCHW tile; w/b: (1, C).
    alpha = alpha_ref[0, 0]
    x = x_ref[...].astype(jnp.float32)
    y = (jnp.tanh(alpha * x) * w_ref[...] + b_ref[...]).astype(o_ref.dtype)
    o_ref[...] = jnp.transpose(y)    # XLU transpose; kernel is DMA-bound


# ---------------------------------------------------------------------------
# Wrappers
# ---------------------------------------------------------------------------

@jax.jit
def _dyntanh_rows(x, alpha, weight, bias):
    """Channels-last / generic path: y = w*tanh(a*x)+b over the last dim."""
    h = weight.shape[0]
    itemsize = jnp.dtype(x.dtype).itemsize
    sublane = 8 if itemsize == 4 else 16            # (8,128) f32 / (16,128) bf16

    x2 = x.reshape(-1, h)
    n_rows = x2.shape[0]

    # Lane-dense packing: fold `pack` rows so the lane width is a 128-multiple.
    pack = 128 // math.gcd(h, 128)
    lane_w = pack * h

    # Pad at most pack-1 rows (only if needed) so the packed reshape is valid;
    # ragged row tiles are handled by a cdiv grid (Pallas masks the tail).
    n_pad_rows = (-n_rows) % pack
    if n_pad_rows:
        x2 = jnp.concatenate([x2, jnp.zeros((n_pad_rows, h), x2.dtype)], axis=0)
    rows_packed = (n_rows + n_pad_rows) // pack
    xp = x2.reshape(rows_packed, lane_w)

    # Row tile: ~_TARGET_TILE_BYTES per block, sublane-rounded, clamped so the
    # grid keeps >= ~4 blocks (v7x has 2 TensorCores) and never exceeds rows.
    tile_rows = _round_down(_TARGET_TILE_BYTES // (lane_w * itemsize), sublane)
    tile_rows = max(sublane, tile_rows)
    tile_rows = min(tile_rows, _round_up(pl.cdiv(rows_packed, 4), sublane))
    tile_rows = min(tile_rows, rows_packed)
    grid = (pl.cdiv(rows_packed, tile_rows),)
    tile_bytes = tile_rows * lane_w * itemsize

    alpha2 = alpha.reshape(1, 1).astype(jnp.float32)
    w2 = jnp.tile(weight.astype(jnp.float32), pack).reshape(1, lane_w)
    b2 = jnp.tile(bias.astype(jnp.float32), pack).reshape(1, lane_w)

    outp = pl.pallas_call(
        _dyntanh_kernel,
        out_shape=jax.ShapeDtypeStruct((rows_packed, lane_w), x.dtype),
        grid=grid,
        in_specs=[
            pl.BlockSpec(memory_space=pltpu.MemorySpace.SMEM),      # alpha
            pl.BlockSpec((1, lane_w), lambda i: (0, 0)),            # weight
            pl.BlockSpec((1, lane_w), lambda i: (0, 0)),            # bias
            pl.BlockSpec((tile_rows, lane_w), lambda i: (i, 0)),    # x tile
        ],
        out_specs=pl.BlockSpec((tile_rows, lane_w), lambda i: (i, 0)),
        compiler_params=pltpu.CompilerParams(
            dimension_semantics=("parallel",),
            vmem_limit_bytes=_vmem_limit(tile_bytes),
        ),
    )(alpha2, w2, b2, xp)

    out2 = outp.reshape(rows_packed * pack, h)
    if n_pad_rows:
        out2 = out2[:n_rows]
    return out2.reshape(x.shape)


@jax.jit
def _dyntanh_nchw(x, alpha, weight, bias):
    """Fused path for channels_last=False, 4-D NHWC input -> NCHW output."""
    n, hh, ww, c = x.shape
    hw = hh * ww
    itemsize = jnp.dtype(x.dtype).itemsize
    x3 = x.reshape(n, hw, c)

    # hw tile: 128-multiple (lane-dense NCHW stores), ~target bytes per block,
    # clamped so the grid keeps >= ~4 total blocks and t_hw <= hw.
    t_hw = max(128, _round_down(_TARGET_TILE_BYTES // (c * itemsize), 128))
    desired_hw_blocks = max(1, pl.cdiv(4, n))
    t_hw = min(t_hw, _round_up(pl.cdiv(hw, desired_hw_blocks), 128))
    t_hw = min(t_hw, _round_down(hw, 128))          # caller guarantees hw >= 128
    grid = (n, pl.cdiv(hw, t_hw))
    tile_bytes = t_hw * c * itemsize

    alpha2 = alpha.reshape(1, 1).astype(jnp.float32)
    w2 = weight.astype(jnp.float32).reshape(1, c)
    b2 = bias.astype(jnp.float32).reshape(1, c)

    out3 = pl.pallas_call(
        _dyntanh_nchw_kernel,
        out_shape=jax.ShapeDtypeStruct((n, c, hw), x.dtype),
        grid=grid,
        in_specs=[
            pl.BlockSpec(memory_space=pltpu.MemorySpace.SMEM),        # alpha
            pl.BlockSpec((1, c), lambda i, j: (0, 0)),                # weight
            pl.BlockSpec((1, c), lambda i, j: (0, 0)),                # bias
            pl.BlockSpec((None, t_hw, c), lambda i, j: (i, j, 0)),    # NHWC tile
        ],
        out_specs=pl.BlockSpec((None, c, t_hw), lambda i, j: (i, 0, j)),  # NCHW tile
        compiler_params=pltpu.CompilerParams(
            dimension_semantics=("parallel", "parallel"),
            vmem_limit_bytes=_vmem_limit(tile_bytes),
        ),
    )(alpha2, w2, b2, x3)
    return out3.reshape(n, c, hh, ww)


_NCHW_FUSED_OK = True  # one-shot fallback guard for the fused transpose path


def fused_dynamic_tanh(x, alpha, weight, bias, *, channels_last=True):
    """Pallas implementation of FusedDynamicTanh.forward.

    x:      any shape whose last dim == normalized_shape
    alpha:  shape (1,) float32
    weight: shape (normalized_shape,)
    bias:   shape (normalized_shape,)
    """
    global _NCHW_FUSED_OK
    assert x.dtype in (jnp.float16, jnp.bfloat16, jnp.float32), x.dtype
    h = weight.shape[0]

    use_fused_nchw = (
        (not channels_last)
        and x.ndim == 4
        and x.shape[-1] == h
        and (x.shape[1] * x.shape[2]) >= 128
        and h % 8 == 0
        and _NCHW_FUSED_OK
    )
    if use_fused_nchw:
        try:
            return _dyntanh_nchw(x, alpha, weight, bias)
        except Exception:
            # TODO(synk): if Mosaic rejects the in-kernel transpose on some
            # generation, we fall back to the unfused path (extra HBM pass).
            _NCHW_FUSED_OK = False

    out = _dyntanh_rows(x, alpha, weight, bias)
    if (not channels_last) and out.ndim == 4:
        # Unfused fallback (tiny spatial extent or transpose fallback above).
        out = jnp.transpose(out, (0, 3, 1, 2))
    return out


# ---------------------------------------------------------------------------
# Self-test
# ---------------------------------------------------------------------------

if __name__ == "__main__":
    normalized_shape = 32
    alpha = jnp.full((1,), 0.5, dtype=jnp.float32)

    key = jax.random.PRNGKey(0)
    kw, kb, k0, k1, k2 = jax.random.split(key, 5)
    weight = jax.random.normal(kw, (normalized_shape,), dtype=jnp.float32)
    bias = jax.random.normal(kb, (normalized_shape,), dtype=jnp.float32)

    def reference(x, channels_last):
        y = (weight * jnp.tanh(alpha[0] * x.astype(jnp.float32)) + bias).astype(x.dtype)
        if (not channels_last) and y.ndim == 4:
            y = jnp.transpose(y, (0, 3, 1, 2))
        return y

    # Case 1: NHWC, channels_last=True, f32; ragged final row-tile (masked).
    x1 = jax.random.normal(k0, (2, 9, 8, normalized_shape), dtype=jnp.float32)
    out1 = jax.block_until_ready(
        fused_dynamic_tanh(x1, alpha, weight, bias, channels_last=True))
    ref1 = reference(x1, True)
    assert out1.shape == ref1.shape
    assert jnp.allclose(out1, ref1, atol=1e-5, rtol=1e-5), "case1 mismatch"

    # Case 2: channels_last=False 4-D -> fused NHWC->NCHW kernel (hw=130,
    # ragged hw tile + in-kernel transpose).
    x2 = jax.random.normal(k1, (2, 10, 13, normalized_shape), dtype=jnp.float32)
    out2 = jax.block_until_ready(
        fused_dynamic_tanh(x2, alpha, weight, bias, channels_last=False))
    ref2 = reference(x2, False)
    assert out2.shape == ref2.shape
    assert jnp.allclose(out2, ref2, atol=1e-5, rtol=1e-5), "case2 mismatch"

    # Case 3: bf16 3-D input; n_rows=15 not a multiple of pack=4 (small pad),
    # 16-sublane tile rounding.
    x3 = jax.random.normal(k2, (3, 5, normalized_shape), dtype=jnp.bfloat16)
    out3 = jax.block_until_ready(
        fused_dynamic_tanh(x3, alpha, weight, bias, channels_last=True))
    ref3 = reference(x3, True)
    assert out3.shape == ref3.shape
    assert jnp.allclose(out3.astype(jnp.float32), ref3.astype(jnp.float32),
                        atol=2e-2, rtol=2e-2), "case3 mismatch"

    print("KERNEL_OK")
</pallas_src>

<mosaic_0001>
module attributes {stable_mosaic.version = 11 : i64} {
  func.func @_dyntanh_kernel(%arg0: i32, %arg1: memref<1x1xf32, #tpu.memory_space<smem>>, %arg2: memref<1x128xf32, #tpu.memory_space<vmem>>, %arg3: memref<1x128xf32, #tpu.memory_space<vmem>>, %arg4: memref<16x128xf32, #tpu.memory_space<vmem>>, %arg5: memref<16x128xf32, #tpu.memory_space<vmem>>) attributes {dimension_semantics = [#tpu.dimension_semantics<parallel>], iteration_bounds = array<i64: 3>, scalar_prefetch = 0 : i64, scratch_operands = 0 : i64, tpu.core_type = #tpu.core_type<tc>, window_params = [{transform_indices = @transform_0, window_bounds = array<i64: 1, 1>}, {pipeline_mode = #tpu.pipeline_mode<synchronous>, transform_indices = @transform_1, window_bounds = array<i64: 1, 128>}, {pipeline_mode = #tpu.pipeline_mode<synchronous>, transform_indices = @transform_2, window_bounds = array<i64: 1, 128>}, {transform_indices = @transform_3, window_bounds = array<i64: 16, 128>}, {transform_indices = @transform_4, window_bounds = array<i64: 16, 128>}]} {
    %c0 = arith.constant 0 : index
    %c0_0 = arith.constant 0 : index
    %0 = memref.load %arg1[%c0, %c0_0] : memref<1x1xf32, #tpu.memory_space<smem>>
    %c0_1 = arith.constant 0 : index
    %c0_2 = arith.constant 0 : index
    %1 = vector.load %arg4[%c0_1, %c0_2] : memref<16x128xf32, #tpu.memory_space<vmem>>, vector<16x128xf32>
    %2 = vector.broadcast %0 : f32 to vector<16x128xf32>
    %3 = arith.mulf %2, %1 : vector<16x128xf32>
    %4 = math.tanh %3 : vector<16x128xf32>
    %c0_3 = arith.constant 0 : index
    %c0_4 = arith.constant 0 : index
    %5 = vector.load %arg2[%c0_3, %c0_4] : memref<1x128xf32, #tpu.memory_space<vmem>>, vector<1x128xf32>
    %6 = vector.broadcast %5 : vector<1x128xf32> to vector<16x128xf32>
    %7 = arith.mulf %4, %6 : vector<16x128xf32>
    %c0_5 = arith.constant 0 : index
    %c0_6 = arith.constant 0 : index
    %8 = vector.load %arg3[%c0_5, %c0_6] : memref<1x128xf32, #tpu.memory_space<vmem>>, vector<1x128xf32>
    %9 = vector.broadcast %8 : vector<1x128xf32> to vector<16x128xf32>
    %10 = arith.addf %7, %9 : vector<16x128xf32>
    %c0_7 = arith.constant 0 : index
    %c0_8 = arith.constant 0 : index
    %11 = vector.load %arg5[%c0_7, %c0_8] : memref<16x128xf32, #tpu.memory_space<vmem>>, vector<16x128xf32>
    tpu.vector_store %arg5[%c0_7, %c0_8], %10 {strides = array<i32>} : memref<16x128xf32, #tpu.memory_space<vmem>>, vector<16x128xf32>,
    return
  }
  func.func @transform_0(%arg0: i32) -> (i32, i32) {
    %c0_i32 = arith.constant 0 : i32
    %c0_i32_0 = arith.constant 0 : i32
    %c0_i32_1 = arith.constant 0 : i32
    return %c0_i32, %c0_i32_0 : i32, i32
  }
  func.func @transform_1(%arg0: i32) -> (i32, i32) {
    %c0_i32 = arith.constant 0 : i32
    %c0_i32_0 = arith.constant 0 : i32
    %c0_i32_1 = arith.constant 0 : i32
    return %c0_i32, %c0_i32_0 : i32, i32
  }
  func.func @transform_2(%arg0: i32) -> (i32, i32) {
    %c0_i32 = arith.constant 0 : i32
    %c0_i32_0 = arith.constant 0 : i32
    %c0_i32_1 = arith.constant 0 : i32
    return %c0_i32, %c0_i32_0 : i32, i32
  }
  func.func @transform_3(%arg0: i32) -> (i32, i32) {
    %c0_i32 = arith.constant 0 : i32
    %c0_i32_0 = arith.constant 0 : i32
    return %arg0, %c0_i32 : i32, i32
  }
  func.func @transform_4(%arg0: i32) -> (i32, i32) {
    %c0_i32 = arith.constant 0 : i32
    %c0_i32_0 = arith.constant 0 : i32
    return %arg0, %c0_i32 : i32, i32
  }
}

</mosaic_0001>

<llo_original>
// kernel: tile.14
$region0: #{tile.14}
  %s0 = inlined_call_operand.vmem [shape: f32[4,32], index: 0, kind: input, shape index: {}]
  %s1 = inlined_call_operand.vmem [shape: f32[1,128], index: 1, kind: output, shape index: {}]
  $region1: #{tile.14} parent=0
    #allocation0 [shape = 'u8[4096]{0}', space=vmem, size = 0x1000, scoped, tag = 'scoped mem for output reshape']
    #allocation1 [shape = 'u8[4096]{0}', space=vmem, size = 0x1000, scoped, tag = 'scoped mem for input reshape']
    %s3 = ssub.s32 16, 1
    %v4 = vld [vmem:[%s0] sm:%s3]
    %5 = vst [vmem:[#allocation1] sm:%s3] %v4
    %v6 = vld [vmem:[#allocation1] sm:$0x1]
    %vm7 = vcmask 261120
    %8 = vst.msk [vmem:[#allocation0] sm:$0x1] %vm7, %v6
    %s9 = scalar_lea.vmem [#allocation1], 3
    %v10 = vld [vmem:[%s9] sm:$0x1]
    %11 = vrot.lane.b32.xlu0 %v10, 96
    %v12 = vpop.permute.xlu0 %11
    %vm13 = vcmask 1048320
    %14 = vst.msk [vmem:[#allocation0] sm:$0x1] %vm13, %v12
    %s15 = scalar_lea.vmem [#allocation1], 2
    %v16 = vld [vmem:[%s15] sm:$0x1]
    %17 = vrot.lane.b32.xlu0 %v16, 64
    %v18 = vpop.permute.xlu0 %17
    %vm19 = vcmask 785920
    %20 = vst.msk [vmem:[#allocation0] sm:$0x1] %vm19, %v18
    %s21 = scalar_lea.vmem [#allocation1], 1
    %v22 = vld [vmem:[%s21] sm:$0x1]
    %23 = vrot.lane.b32.xlu0 %v22, 32
    %v24 = vpop.permute.xlu0 %23
    %vm25 = vcmask 523520
    %26 = vst.msk [vmem:[#allocation0] sm:$0x1] %vm25, %v24
    %s28 = ssub.s32 2, 1
    %v29 = vld [vmem:[#allocation0] sm:%s28]
    %s31 = ssub.s32 2, 1
    %32 = vst [vmem:[%s1] sm:%s31] %v29

// kernel: tile.13
$region0: #{tile.13}
  #allocation0 [shape = 's32[1]{0}', space=sflag, size = 0x4, scoped, tag = 'scoped memory for tile.13']
  %s0 = inlined_call_operand.vmem [shape: f32[32], index: 0, kind: input, shape index: {}]
  %s1 = inlined_call_operand.vmem [shape: f32[4,32], index: 1, kind: output, shape index: {}]
  // Predicated region
  $region2: #{tile.13} parent=0 // pred_check
    _
  $region3: #{tile.13} parent=0 // pred_check_branch
    %3 = sbr.rel (0) target = $region5
  $region4: #{tile.13} parent=0 // pred_region
    _
  $region5: #{tile.13} parent=0 // pred_fallthru
    _
  %v4 = vld [vmem:[%s0] ss:$0 sm:$0xff]
  %5 = vst [vmem:[%s1] sm:$0xf] %v4

// kernel: _dyntanh_rows.1
$region0: #{_dyntanh_rows.1}
  #allocation0 [shape = 'u32[]', space=smem, size = 0x4, offset = 0x4, fixed_abs, tag = 'smem constant byte address 0x4 - core index']
  #allocation1 [shape = 'u32[72,128]{1,0:T(1,128)}', space=vmem, size = 0x9000, scoped, tag = 'internal scratch']
  #allocation2 [shape = 'f32[1,1]{1,0:T(1,128)S(6)}', space=smem, size = 0x200, scoped, tag = 'scoped memory for _dyntanh_rows.1']
  %s0 = inlined_call_operand.<no memory space> [shape: f32[1,1], index: 0, kind: input, shape index: {}]
  %s1 = inlined_call_operand.vmem [shape: f32[1,128], index: 1, kind: input, shape index: {}]
  %s2 = inlined_call_operand.vmem [shape: f32[1,128], index: 2, kind: input, shape index: {}]
  %s3 = inlined_call_operand.vmem [shape: f32[36,128], index: 3, kind: input, shape index: {}]
  %s4 = inlined_call_operand.vmem [shape: f32[36,128], index: 4, kind: output, shape index: {}]
  %s5 = sld [smem:[#allocation0]]
  $region97: #{_dyntanh_rows.1} parent=0
    _
  %s7 = ssub.s32 1, %s5
  %s8 = scalar_select 0, %s7, %s5
  %9 = sst [smem:[#allocation2]] %s0
  $region1: #{_dyntanh_rows.1} parent=0
    #allocation3 [shape = 'u8[16384]{0}', space=vmem, size = 0x4000, scoped, tag = 'output window, operand 0']
    loop: start=0, step=1, limit=5
    $region2: #{_dyntanh_rows.1} parent=1 // loop_pre_header
      _
    $region3: #{_dyntanh_rows.1} parent=1 // loop_header
      %s11 = sphi 0, %s15
      %p12 = scmp.ge.s32.totalorder %s11, 5
      %s19 = sphi 0, %s19
      %s21 = sphi 0, %s19
      %s22 = sphi 0, %s21
      %s36 = sphi 0, %s22
      %s40 = sphi 0, %s40
      %s42 = sphi 0, %s40
      %s43 = sphi 0, %s42
      %s57 = sphi 0, %s43
      %s61 = sphi 0, %s61
      %s63 = sphi 0, %s61
      %s64 = sphi 0, %s63
      %s78 = sphi 0, %s64
      %s84 = sphi 0, %s86
      %s87 = sphi 0, %s84
      %s88 = sphi 0, %s87
      %s104 = sphi 0, %s88
      %s110 = sphi 0, %s112
      %s113 = sphi 0, %s110
      %s114 = sphi 0, %s113
      %s130 = sphi 0, %s114
    $region4: #{_dyntanh_rows.1} parent=1 // loop_header_branch
      %14 = sbr.rel (%p12) target = $region8
    $region5: #{_dyntanh_rows.1} parent=1 // loop_body
      %s16 = ssub.s32 %s11, 1
      %s17 = ssub.s32 %s11, 2
      %s18 = sadd.s32 %s11, 1
      %s20 = sadd.s32 %s19, 1
      %p23 = scmp.eq.s32.totalorder %s11, 2
      %p24 = scmp.ne.s32.totalorder %s19, %s21
      %p25 = scmp.eq.s32.totalorder %s11, 0
      %p26 = por %p24, %p25
      %p27 = scmp.ne.s32.totalorder %s19, %s21
      %p28 = scmp.eq.s32.totalorder %s16, 2
      %p29 = por %p27, %p28
      %p30 = scmp.ne.s32.totalorder %s21, %s22
      %p31 = scmp.eq.s32.totalorder %s16, 0
      %p32 = por %p30, %p31
      %p33 = scmp.ne.s32.totalorder %s21, %s22
      %p34 = scmp.eq.s32.totalorder %s17, 2
      %p35 = por %p33, %p34
      %p37 = scmp.ne.s32.totalorder %s22, %s36
      %p38 = scmp.eq.s32.totalorder %s17, 0
      %p39 = por %p37, %p38
      %s41 = sadd.s32 %s40, 1
      %p44 = scmp.eq.s32.totalorder %s11, 2
      %p45 = scmp.ne.s32.totalorder %s40, %s42
      %p46 = scmp.eq.s32.totalorder %s11, 0
      %p47 = por %p45, %p46
      %p48 = scmp.ne.s32.totalorder %s40, %s42
      %p49 = scmp.eq.s32.totalorder %s16, 2
      %p50 = por %p48, %p49
      %p51 = scmp.ne.s32.totalorder %s42, %s43
      %p52 = scmp.eq.s32.totalorder %s16, 0
      %p53 = por %p51, %p52
      %p54 = scmp.ne.s32.totalorder %s42, %s43
      %p55 = scmp.eq.s32.totalorder %s17, 2
      %p56 = por %p54, %p55
      %p58 = scmp.ne.s32.totalorder %s43, %s57
      %p59 = scmp.eq.s32.totalorder %s17, 0
      %p60 = por %p58, %p59
      %s62 = sadd.s32 %s61, 1
      %p65 = scmp.eq.s32.totalorder %s11, 2
      %p66 = scmp.ne.s32.totalorder %s61, %s63
      %p67 = scmp.eq.s32.totalorder %s11, 0
      %p68 = por %p66, %p67
      %p69 = scmp.ne.s32.totalorder %s61, %s63
      %p70 = scmp.eq.s32.totalorder %s16, 2
      %p71 = por %p69, %p70
      %p72 = scmp.ne.s32.totalorder %s63, %s64
      %p73 = scmp.eq.s32.totalorder %s16, 0
      %p74 = por %p72, %p73
      %p75 = scmp.ne.s32.totalorder %s63, %s64
      %p76 = scmp.eq.s32.totalorder %s17, 2
      %p77 = por %p75, %p76
      %p79 = scmp.ne.s32.totalorder %s64, %s78
      %p80 = scmp.eq.s32.totalorder %s17, 0
      %p81 = por %p79, %p80
      %s82 = ssub.s32 %s11, %s18
      %p83 = scmp.eq.s32.totalorder %s82, 0
      %s85 = sadd.s32 %s84, 1
      %s86 = scalar_select %p83, %s84, %s85
      %p89 = pneg %p83
      %p90 = scmp.eq.s32.totalorder %s11, 2
      %p91 = por %p89, %p90
      %p92 = scmp.ne.s32.totalorder %s84, %s87
      %p93 = scmp.eq.s32.totalorder %s11, 0
      %p94 = por %p92, %p93
      %p95 = scmp.ne.s32.totalorder %s84, %s87
      %p96 = scmp.eq.s32.totalorder %s16, 2
      %p97 = por %p95, %p96
      %p98 = scmp.ne.s32.totalorder %s87, %s88
      %p99 = scmp.eq.s32.totalorder %s16, 0
      %p100 = por %p98, %p99
      %p101 = scmp.ne.s32.totalorder %s87, %s88
      %p102 = scmp.eq.s32.totalorder %s17, 2
      %p103 = por %p101, %p102
      %p105 = scmp.ne.s32.totalorder %s88, %s104
      %p106 = scmp.eq.s32.totalorder %s17, 0
      %p107 = por %p105, %p106
      %s108 = ssub.s32 %s11, %s18
      %p109 = scmp.eq.s32.totalorder %s108, 0
      %s111 = sadd.s32 %s110, 1
      %s112 = scalar_select %p109, %s110, %s111
      %p115 = pneg %p109
      %p116 = scmp.eq.s32.totalorder %s11, 2
      %p117 = por %p115, %p116
      %p118 = scmp.ne.s32.totalorder %s110, %s113
      %p119 = scmp.eq.s32.totalorder %s11, 0
      %p120 = por %p118, %p119
      %p121 = scmp.ne.s32.totalorder %s110, %s113
      %p122 = scmp.eq.s32.totalorder %s16, 2
      %p123 = por %p121, %p122
      %p124 = scmp.ne.s32.totalorder %s113, %s114
      %p125 = scmp.eq.s32.totalorder %s16, 0
      %p126 = por %p124, %p125
      %p127 = scmp.ne.s32.totalorder %s113, %s114
      %p128 = scmp.eq.s32.totalorder %s17, 2
      %p129 = por %p127, %p128
      %p131 = scmp.ne.s32.totalorder %s114, %s130
      %p132 = scmp.eq.s32.totalorder %s17, 0
      %p133 = por %p131, %p132
      %p134 = scmp.le.s32.totalorder 1, %s11
      %p135 = scmp.lt.s32.totalorder %s11, 4
      %p136 = pnand %p134, %p135
      %p137 = pneg %p136
      // Predicated region
      $region9: #{_dyntanh_rows.1} parent=5 // pred_check
        _
      $region10: #{_dyntanh_rows.1} parent=5 // pred_check_branch
        %139 = sbr.rel (%p136) target = $region12
      $region11: #{_dyntanh_rows.1} parent=5 // pred_region
        %s140 = ssub.s32 %s11, 1
        // Predicated region
        $region13: #{_dyntanh_rows.1} parent=11 // pred_check
          %p141 = pneg %p32
        $region14: #{_dyntanh_rows.1} parent=11 // pred_check_branch
          %143 = sbr.rel (%p141) target = $region16
        $region15: #{_dyntanh_rows.1} parent=11 // pred_region
          _
        $region16: #{_dyntanh_rows.1} parent=11 // pred_fallthru
          _
        // Predicated region
        $region17: #{_dyntanh_rows.1} parent=11 // pred_check
          %p144 = pneg %p53
        $region18: #{_dyntanh_rows.1} parent=11 // pred_check_branch
          %146 = sbr.rel (%p144) target = $region20
        $region19: #{_dyntanh_rows.1} parent=11 // pred_region
          _
        $region20: #{_dyntanh_rows.1} parent=11 // pred_fallthru
          _
        // Predicated region
        $region21: #{_dyntanh_rows.1} parent=11 // pred_check
          %p147 = pneg %p74
        $region22: #{_dyntanh_rows.1} parent=11 // pred_check_branch
          %149 = sbr.rel (%p147) target = $region24
        $region23: #{_dyntanh_rows.1} parent=11 // pred_region
          _
        $region24: #{_dyntanh_rows.1} parent=11 // pred_fallthru
          _
      $region12: #{_dyntanh_rows.1} parent=5 // pred_fallthru
        _
      %p150 = scmp.lt.s32.totalorder %s11, 3
      // Predicated region
      $region25: #{_dyntanh_rows.1} parent=5 // pred_check
        %p151 = pneg %p150
      $region26: #{_dyntanh_rows.1} parent=5 // pred_check_branch
        %153 = sbr.rel (%p151) target = $region28
      $region27: #{_dyntanh_rows.1} parent=5 // pred_region
        // Predicated region
        $region29: #{_dyntanh_rows.1} parent=27 // pred_check
          %p154 = pneg %p94
        $region30: #{_dyntanh_rows.1} parent=27 // pred_check_branch
          %156 = sbr.rel (%p154) target = $region32
        $region31: #{_dyntanh_rows.1} parent=27 // pred_region
          %s157 = smul.u32 2, %s11
          %s158 = ssub.s32 5, %s157
          %p159 = scmp.lt.s32.totalorder %s158, 2
          %s160 = scalar_select %p159, %s158, 2
          %s161 = smul.u32 8, %s160
          %p162 = scmp.lt.s32.totalorder %s157, 4
          %s163 = scalar_select %p162, %s157, 4
          %s164 = smul.addr %s163, 8
          %s165 = scalar_lea.vmem %s3, %s164
          %s166 = smul.u32 2, %s11
          %s167 = ssub.s32 5, %s166
          %p168 = scmp.lt.s32.totalorder %s167, 2
          %s169 = scalar_select %p168, %s167, 2
          %s170 = smul.u32 8, %s169
        $region32: #{_dyntanh_rows.1} parent=27 // pred_fallthru
          _
      $region28: #{_dyntanh_rows.1} parent=5 // pred_fallthru
        _
      %p171 = scmp.le.s32.totalorder 1, %s11
      %p172 = scmp.lt.s32.totalorder %s11, 4
      %p173 = pnand %p171, %p172
      %p174 = pneg %p173
      // Predicated region
      $region33: #{_dyntanh_rows.1} parent=5 // pred_check
        _
      $region34: #{_dyntanh_rows.1} parent=5 // pred_check_branch
        %176 = sbr.rel (%p173) target = $region36
      $region35: #{_dyntanh_rows.1} parent=5 // pred_region
        %s177 = ssub.s32 %s11, 1
        %p178 = pneg %p32
        %p179 = pneg %p29
        %p180 = pneg %p53
        %p181 = pneg %p50
        %p182 = pneg %p74
        %p183 = pneg %p71
        %s184 = smul.u32 2, %s16
        %s185 = ssub.s32 5, %s184
        %p186 = scmp.lt.s32.totalorder %s185, 2
        %s187 = scalar_select %p186, %s185, 2
        %s188 = smul.u32 8, %s187
        %p189 = scmp.lt.s32.totalorder %s184, 4
        %s190 = scalar_select %p189, %s184, 4
        %s191 = smul.addr %s190, 8
        %s192 = scalar_lea.vmem %s3, %s191
        %p193 = pneg %p100
        %p194 = pneg %p97
        %p195 = pneg %p126
        %p196 = pneg %p123
        %s197 = sand.u32 %s113, 1
        %s198 = sand.u32 %s113, 1
        %s199 = smul.addr %s198, 16
        %s200 = scalar_lea.vmem [#allocation3], %s199
        %s201 = smul.u32 2, %s16
        %s202 = ssub.s32 5, %s201
        %p203 = scmp.lt.s32.totalorder %s202, 2
        %s204 = scalar_select %p203, %s202, 2
        %s205 = smul.u32 8, %s204
        %p206 = scmp.lt.s32.totalorder %s201, 4
        %s207 = scalar_select %p206, %s201, 4
        %s208 = smul.addr %s207, 8
        %s209 = scalar_lea.vmem %s3, %s208
        %s210 = smul.u32 2, %s16
        %s211 = ssub.s32 5, %s210
        %p212 = scmp.lt.s32.totalorder %s211, 2
        %s213 = scalar_select %p212, %s211, 2
        %s214 = smul.u32 8, %s213
        %s215 = smul.u32 2, %s16
        %s216 = ssub.s32 5, %s215
        %p217 = scmp.lt.s32.totalorder %s216, 2
        %s218 = scalar_select %p217, %s216, 2
        %s219 = smul.u32 8, %s218
        %s220 = sld [smem:[#allocation2]]
        %v221 = vld [vmem:[%s209] sm:$0xff]
        %v222 = vld [vmem:[%s209 + $0x8] sm:$0xff]
        %v223 = vstv %s220
        %v224 = vmul.f32 %v223, %v221
        %v225 = vmul.f32 %v223, %v222
        %v226 = vtanh.pop %v224
        %v227 = vtanh.pop %v225
        %v228 = vld [vmem:[%s1] sm:$0x1]
        %v230 = vperm.slane %v228, 0
        %v232 = vmul.f32 %v226, %v230
        %v233 = vmul.f32 %v227, %v230
        %v234 = vld [vmem:[%s2] sm:$0x1]
        %v236 = vperm.slane %v234, 0
        %v238 = vadd.f32 %v232, %v236
        %v239 = vadd.f32 %v233, %v236
        %240 = vst [vmem:[%s200] sm:$0xff] %v238
        %241 = vst [vmem:[%s200 + $0x8] sm:$0xff] %v239
        %s242 = sand.u32 %s113, 1
        %s243 = sand.u32 %s113, 1
        %s244 = smul.addr %s243, 16
        %s245 = scalar_lea.vmem [#allocation3], %s244
        // Predicated region
        $region37: #{_dyntanh_rows.1} parent=35 // pred_check
          %p246 = pneg %p123
        $region38: #{_dyntanh_rows.1} parent=35 // pred_check_branch
          %248 = sbr.rel (%p246) target = $region40
        $region39: #{_dyntanh_rows.1} parent=35 // pred_region
          %s249 = smul.u32 2, %s16
          %s250 = ssub.s32 5, %s249
          %p251 = scmp.lt.s32.totalorder %s250, 2
          %s252 = scalar_select %p251, %s250, 2
          %s253 = smul.u32 8, %s252
          %p254 = scmp.ne.s32.totalorder 0, %s253
          %s255 = smul.addr %s249, 8
          %s256 = scalar_lea.vmem %s4, %s255
          // Predicated region
          $region41: #{_dyntanh_rows.1} parent=39 // pred_check
            %p257 = pneg %p254
          $region42: #{_dyntanh_rows.1} parent=39 // pred_check_branch
            %259 = sbr.rel (%p257) target = $region44
          $region43: #{_dyntanh_rows.1} parent=39 // pred_region
            // Predicated region
            $region45: #{_dyntanh_rows.1} parent=43 // pred_check
              _
            $region46: #{_dyntanh_rows.1} parent=43 // pred_check_branch
              %261 = sbr.rel (0) target = $region48
            $region47: #{_dyntanh_rows.1} parent=43 // pred_region
              // Predicated region
              $region67: #{_dyntanh_rows.1} parent=47 // pred_check
                _
              $region68: #{_dyntanh_rows.1} parent=47 // pred_check_branch
                %313 = sbr.rel (0) target = $region70
              $region69: #{_dyntanh_rows.1} parent=47 // pred_region
                %s314 = sshrl.u32 %s252, 1
                // While loop
                $region71: #{_dyntanh_rows.1} parent=69 // loop_pre_header
                  _
                $region72: #{_dyntanh_rows.1} parent=69 // loop_header
                  %s316 = sphi 0, %s318
                  %p317 = scmp.ge.s32.totalorder %s316, %s314
                  %s321 = sphi 0, %s330
                  %s322 = sphi %s245, %s333
                  %s323 = sphi %s256, %s334
                $region73: #{_dyntanh_rows.1} parent=69 // loop_header_branch
                  %320 = sbr.rel (%p317) target = $region77
                $region74: #{_dyntanh_rows.1} parent=69 // loop_body
                  %v324 = vld [vmem:[%s322] sm:$0xff]
                  %325 = vst [vmem:[%s323] sm:$0xff] %v324
                  %v326 = vld [vmem:[%s322 + $0x8] sm:$0xff]
                  %327 = vst [vmem:[%s323 + $0x8] sm:$0xff] %v326
                  %s328 = sadd.s32 1, %s321
                  %p329 = scmp.ge.s32.totalorder %s328, %s314
                  %s330 = scalar_select %p329, 0, %s328
                  %s331 = smul.u32 %s330, 16
                  %s332 = smul.u32 %s330, 16
                  %s333 = scalar_lea.vmem %s245, %s331 [#allocation3]
                  %s334 = scalar_lea.vmem %s256, %s332
                $region75: #{_dyntanh_rows.1} parent=69 // loop_footer
                  %s318 = sadd.s32 %s316, 1
                $region76: #{_dyntanh_rows.1} parent=69 // loop_footer_branch
                  %315 = sbr.rel target = $region72
                $region77: #{_dyntanh_rows.1} parent=69 // loop_exit
                  _
                %s335 = sshrl.u32 %s252, 1
                %s336 = sand.u32 %s252, 1
                %s337 = smul.u32 %s335, 2
                %s338 = smul.u32 8, %s337
                %s339 = scalar_lea.vmem %s245, %s338 [#allocation3]
                %s340 = smul.u32 8, %s337
                %s341 = scalar_lea.vmem %s256, %s340
                // While loop
                $region78: #{_dyntanh_rows.1} parent=69 // loop_pre_header
                  _
                $region79: #{_dyntanh_rows.1} parent=69 // loop_header
                  %s343 = sphi 0, %s345
                  %p344 = scmp.ge.s32.totalorder %s343, %s336
                  %s348 = sphi 0, %s355
                  %s349 = sphi %s339, %s358
                  %s350 = sphi %s341, %s359
                $region80: #{_dyntanh_rows.1} parent=69 // loop_header_branch
                  %347 = sbr.rel (%p344) target = $region84
                $region81: #{_dyntanh_rows.1} parent=69 // loop_body
                  %v351 = vld [vmem:[%s349] sm:$0xff]
                  %352 = vst [vmem:[%s350] sm:$0xff] %v351
                  %s353 = sadd.s32 1, %s348
                  %p354 = scmp.ge.s32.totalorder %s353, %s336
                  %s355 = scalar_select %p354, 0, %s353
                  %s356 = smul.u32 %s355, 8
                  %s357 = smul.u32 %s355, 8
                  %s358 = scalar_lea.vmem %s339, %s356 [#allocation3]
                  %s359 = scalar_lea.vmem %s341, %s357
                $region82: #{_dyntanh_rows.1} parent=69 // loop_footer
                  %s345 = sadd.s32 %s343, 1
                $region83: #{_dyntanh_rows.1} parent=69 // loop_footer_branch
                  %342 = sbr.rel target = $region79
                $region84: #{_dyntanh_rows.1} parent=69 // loop_exit
                  _
              $region70: #{_dyntanh_rows.1} parent=47 // pred_fallthru
                _
              // Predicated region
              $region85: #{_dyntanh_rows.1} parent=47 // pred_check
                _
              $region86: #{_dyntanh_rows.1} parent=47 // pred_check_branch
                %361 = sbr.rel target = $region88
              $region87: #{_dyntanh_rows.1} parent=47 // pred_region
                _
              $region88: #{_dyntanh_rows.1} parent=47 // pred_fallthru
                _
            $region48: #{_dyntanh_rows.1} parent=43 // pred_fallthru
              _
            // Predicated region
            $region49: #{_dyntanh_rows.1} parent=43 // pred_check
              _
            $region50: #{_dyntanh_rows.1} parent=43 // pred_check_branch
              %263 = sbr.rel target = $region52
            $region51: #{_dyntanh_rows.1} parent=43 // pred_region
              %s265 = ssub.s32 256, 1
              %s266 = sshrl.u32 %s252, 1
              // While loop
              $region53: #{_dyntanh_rows.1} parent=51 // loop_pre_header
                _
              $region54: #{_dyntanh_rows.1} parent=51 // loop_header
                %s268 = sphi 0, %s270
                %p269 = scmp.ge.s32.totalorder %s268, %s266
                %s273 = sphi 0, %s282
                %s274 = sphi %s245, %s285
                %s275 = sphi %s256, %s286
              $region55: #{_dyntanh_rows.1} parent=51 // loop_header_branch
                %272 = sbr.rel (%p269) target = $region59
              $region56: #{_dyntanh_rows.1} parent=51 // loop_body
                %v276 = vld [vmem:[%s274] sm:%s265]
                %277 = vst [vmem:[%s275] sm:%s265] %v276
                %v278 = vld [vmem:[%s274 + $0x8] sm:%s265]
                %279 = vst [vmem:[%s275 + $0x8] sm:%s265] %v278
                %s280 = sadd.s32 1, %s273
                %p281 = scmp.ge.s32.totalorder %s280, %s266
                %s282 = scalar_select %p281, 0, %s280
                %s283 = smul.u32 %s282, 16
                %s284 = smul.u32 %s282, 16
                %s285 = scalar_lea.vmem %s245, %s283 [#allocation3]
                %s286 = scalar_lea.vmem %s256, %s284
              $region57: #{_dyntanh_rows.1} parent=51 // loop_footer
                %s270 = sadd.s32 %s268, 1
              $region58: #{_dyntanh_rows.1} parent=51 // loop_footer_branch
                %267 = sbr.rel target = $region54
              $region59: #{_dyntanh_rows.1} parent=51 // loop_exit
                _
              %s287 = sshrl.u32 %s252, 1
              %s288 = sand.u32 %s252, 1
              %s289 = smul.u32 %s287, 2
              %s290 = smul.u32 8, %s289
              %s291 = scalar_lea.vmem %s245, %s290 [#allocation3]
              %s292 = smul.u32 8, %s289
              %s293 = scalar_lea.vmem %s256, %s292
              // While loop
              $region60: #{_dyntanh_rows.1} parent=51 // loop_pre_header
                _
              $region61: #{_dyntanh_rows.1} parent=51 // loop_header
                %s295 = sphi 0, %s297
                %p296 = scmp.ge.s32.totalorder %s295, %s288
                %s300 = sphi 0, %s307
                %s301 = sphi %s291, %s310
                %s302 = sphi %s293, %s311
              $region62: #{_dyntanh_rows.1} parent=51 // loop_header_branch
                %299 = sbr.rel (%p296) target = $region66
              $region63: #{_dyntanh_rows.1} parent=51 // loop_body
                %v303 = vld [vmem:[%s301] sm:%s265]
                %304 = vst [vmem:[%s302] sm:%s265] %v303
                %s305 = sadd.s32 1, %s300
                %p306 = scmp.ge.s32.totalorder %s305, %s288
                %s307 = scalar_select %p306, 0, %s305
                %s308 = smul.u32 %s307, 8
                %s309 = smul.u32 %s307, 8
                %s310 = scalar_lea.vmem %s291, %s308 [#allocation3]
                %s311 = scalar_lea.vmem %s293, %s309
              $region64: #{_dyntanh_rows.1} parent=51 // loop_footer
                %s297 = sadd.s32 %s295, 1
              $region65: #{_dyntanh_rows.1} parent=51 // loop_footer_branch
                %294 = sbr.rel target = $region61
              $region66: #{_dyntanh_rows.1} parent=51 // loop_exit
                _
            $region52: #{_dyntanh_rows.1} parent=43 // pred_fallthru
              _
          $region44: #{_dyntanh_rows.1} parent=39 // pred_fallthru
            _
          %362 = vnop
        $region40: #{_dyntanh_rows.1} parent=35 // pred_fallthru
          _
      $region36: #{_dyntanh_rows.1} parent=5 // pred_fallthru
        _
      %p363 = scmp.le.s32.totalorder 2, %s11
      // Predicated region
      $region89: #{_dyntanh_rows.1} parent=5 // pred_check
        %p364 = pneg %p363
      $region90: #{_dyntanh_rows.1} parent=5 // pred_check_branch
        %366 = sbr.rel (%p364) target = $region92
      $region91: #{_dyntanh_rows.1} parent=5 // pred_region
        %s367 = ssub.s32 %s11, 2
        // Predicated region
        $region93: #{_dyntanh_rows.1} parent=91 // pred_check
          %p368 = pneg %p129
        $region94: #{_dyntanh_rows.1} parent=91 // pred_check_branch
          %370 = sbr.rel (%p368) target = $region96
        $region95: #{_dyntanh_rows.1} parent=91 // pred_region
          %s371 = sand.u32 %s114, 1
          %s372 = sand.u32 %s114, 1
          %s373 = smul.addr %s372, 16
          %s374 = scalar_lea.vmem [#allocation3], %s373
        $region96: #{_dyntanh_rows.1} parent=91 // pred_fallthru
          _
      $region92: #{_dyntanh_rows.1} parent=5 // pred_fallthru
        _
    $region6: #{_dyntanh_rows.1} parent=1 // loop_footer
      %s15 = sadd.s32 1, %s11
    $region7: #{_dyntanh_rows.1} parent=1 // loop_footer_branch
      %10 = sbr.rel target = $region3
    $region8: #{_dyntanh_rows.1} parent=1 // loop_exit
      _

</llo_original>
